<compile_context>
chip_gen: v6e
topology: v6e:2x2x1
jax: 0.10.0
libtpu: 0.0.40
codegen_flags: <defaults>
</compile_context>

<pallas_src>
import functools

import jax
import jax.numpy as jnp
import numpy as np
from jax import lax
from jax.experimental import pallas as pl
from jax.experimental.pallas import tpu as pltpu

EPS = 1e-5


def _round_up(x, m):
    return (x + m - 1) // m * m


def _pick_batch_tile(n, cp, pp, vmem_budget_bytes=40 << 20):
    """Largest batch tile whose block double-buffers + temporaries fit VMEM."""
    # ~4x slab (double-buffered in + out blocks) + ~16x slab of in-kernel
    # temporaries (x, n1, 9 rolled taps, stacked operand, r1, n2, out).
    per_image = 20 * cp * pp * 4
    divisors = [d for d in range(1, n + 1) if n % d == 0]
    fits = [d for d in divisors if d * per_image <= vmem_budget_bytes] or [1]
    # Prefer the largest tile that still leaves >= 2 grid steps so both v7x
    # TensorCores get work; extra steps cost only ~0.35us on single-TC chips.
    two_step = [d for d in fits if n // d >= 2]
    return max(two_step) if two_step else max(fits)


def _conv_ode_kernel(x_ref, mask_ref, w1_ref, b1_ref, w2_ref, b2_ref, out_ref,
                     *, hw, wpad, cp, nimg):
    """One grid step == one batch tile of images in padded-flat layout.

    x_ref:    (nimg*Cp, Pp)  zero-padded images, flattened spatial, lane-dense
    mask_ref: (1, Pp)        1.0 on each image's H*W interior, 0.0 elsewhere
    w1_ref:   (Cp, 9*Cp)     conv1 weights, [c_out, tap*Cp + c_in], tap=ky*3+kx
    b1_ref:   (Cp, 1)        conv1 bias
    w2_ref:   (Cp, Cp)       conv2 (1x1) weights
    b2_ref:   (Cp, 1)        conv2 bias
    out_ref:  (nimg*Cp, Pp)  padded-flat output (lane-dense, unmasked store)
    """
    rows, pp = x_ref.shape                      # rows == nimg * cp
    inv_hw = 1.0 / hw

    # Hoisted once per grid step (JAX does not CSE broadcasts).
    mskr = jnp.broadcast_to(mask_ref[...], (rows, pp))
    w1 = w1_ref[...]
    w2 = w2_ref[...]
    b1 = b1_ref[...]
    b2 = b2_ref[...]

    x = x_ref[...]                              # exact 0 outside each interior

    # ---- InstanceNorm2d #1: biased stats over H*W via E[x], E[x^2] ----------
    # x is exactly 0 on border/tail lanes, so full-lane sums == interior sums,
    # and the two reductions are independent (can overlap on the XLUs).
    m1 = jnp.sum(x, axis=-1, keepdims=True) * inv_hw
    v1 = jnp.sum(x * x, axis=-1, keepdims=True) * inv_hw - m1 * m1
    n1 = (x - m1) * lax.rsqrt(v1 + EPS) * mskr      # exact 0 on border/tail

    # ---- Conv2d 3x3, pad=1: rolled taps stacked on the contraction dim ------
    # Tap offset d = (ky-1)*Wp + (kx-1); we need shifted[p] = n1[p + d].
    # For interior lanes 0 <= p+d < Hp*Wp always holds, so roll wrap-around
    # only touches border/tail lanes, which are masked before any reduction.
    taps = []
    for ky in range(3):
        for kx in range(3):
            d = (ky - 1) * wpad + (kx - 1)
            taps.append(n1 if d == 0
                        else pltpu.roll(n1, shift=(-d) % pp, axis=1))

    # Short per-image loop for the matmuls only (channel mixing must not cross
    # images); nimg is kept small by the VMEM-aware batch-tile choice.
    r1_parts = []
    for b in range(nimg):
        sl = slice(b * cp, (b + 1) * cp)
        stacked = jnp.concatenate([t[sl, :] for t in taps], axis=0)  # (9Cp, Pp)
        acc = jnp.dot(w1, stacked, preferred_element_type=jnp.float32)
        r1_parts.append(jnp.maximum(acc + b1, 0.0))
    r1 = (r1_parts[0] if nimg == 1
          else jnp.concatenate(r1_parts, axis=0)) * mskr

    # ---- InstanceNorm2d #2 ---------------------------------------------------
    m2 = jnp.sum(r1, axis=-1, keepdims=True) * inv_hw
    v2 = jnp.sum(r1 * r1, axis=-1, keepdims=True) * inv_hw - m2 * m2
    n2 = (r1 - m2) * lax.rsqrt(v2 + EPS) * mskr     # zero border == conv2 pad

    # ---- Conv2d 1x1 (padding=1) + ReLU: one matmul per image on the padded
    #      grid (the zero border of n2 makes the output border exactly relu(b2))
    out_parts = []
    for b in range(nimg):
        sl = slice(b * cp, (b + 1) * cp)
        o = jnp.dot(w2, n2[sl, :], preferred_element_type=jnp.float32)
        out_parts.append(jnp.maximum(o + b2, 0.0))
    out_ref[...] = (out_parts[0] if nimg == 1
                    else jnp.concatenate(out_parts, axis=0))


def conv_ode_func(x, w1, b1, w2, b2, *, batch_tile=None):
    """ConvODEFunc forward (time_dependent=False, relu).

    x: (N, C, H, W); w1: (C, C, 3, 3); b1: (C,); w2: (C, C, 1, 1); b2: (C,).
    Returns (N, C, H+2, W+2) float32 (the 1x1 conv carries padding=1, exactly
    as in the PyTorch module).
    """
    f32 = jnp.float32
    N, C, H, W = x.shape
    Hp, Wp = H + 2, W + 2
    P2 = Hp * Wp
    Pp = _round_up(P2, 128)                 # lane-dense spatial axis
    Cp = _round_up(C, 8)                    # sublane-aligned channel axis

    # ---- wrapper-side layout plumbing (cheap XLA ops, no compute hoisted) ---
    xp = jnp.pad(x.astype(f32), ((0, 0), (0, Cp - C), (1, 1), (1, 1)))
    xf = jnp.pad(xp.reshape(N, Cp, P2),
                 ((0, 0), (0, 0), (0, Pp - P2))).reshape(N * Cp, Pp)

    mask = jnp.pad(
        jnp.pad(jnp.ones((H, W), f32), ((1, 1), (1, 1))).reshape(1, P2),
        ((0, 0), (0, Pp - P2)))

    w1p = jnp.pad(w1.astype(f32), ((0, Cp - C), (0, Cp - C), (0, 0), (0, 0)))
    w1m = jnp.transpose(w1p, (0, 2, 3, 1)).reshape(Cp, 9 * Cp)  # [co, tap*Cp+ci]
    w2m = jnp.pad(w2.astype(f32).reshape(C, C), ((0, Cp - C), (0, Cp - C)))
    b1c = jnp.pad(b1.astype(f32), (0, Cp - C)).reshape(Cp, 1)
    b2c = jnp.pad(b2.astype(f32), (0, Cp - C)).reshape(Cp, 1)

    bt = batch_tile if batch_tile is not None else _pick_batch_tile(N, Cp, Pp)
    assert N % bt == 0, (N, bt)
    per_image_bytes = 20 * Cp * Pp * 4
    vmem_limit = int(min(64 << 20, max(32 << 20, 2 * bt * per_image_bytes)))

    kernel = functools.partial(_conv_ode_kernel,
                               hw=H * W, wpad=Wp, cp=Cp, nimg=bt)

    out_flat = pl.pallas_call(
        kernel,
        out_shape=jax.ShapeDtypeStruct((N * Cp, Pp), f32),
        grid=(N // bt,),
        in_specs=[
            pl.BlockSpec((bt * Cp, Pp), lambda i: (i, 0)),    # image slab
            pl.BlockSpec((1, Pp), lambda i: (0, 0)),          # interior mask
            pl.BlockSpec((Cp, 9 * Cp), lambda i: (0, 0)),     # conv1 weights
            pl.BlockSpec((Cp, 1), lambda i: (0, 0)),          # conv1 bias
            pl.BlockSpec((Cp, Cp), lambda i: (0, 0)),         # conv2 weights
            pl.BlockSpec((Cp, 1), lambda i: (0, 0)),          # conv2 bias
        ],
        out_specs=pl.BlockSpec((bt * Cp, Pp), lambda i: (i, 0)),
        compiler_params=pltpu.CompilerParams(
            dimension_semantics=("parallel",),
            vmem_limit_bytes=vmem_limit),
    )(xf, mask, w1m, b1c, w2m, b2c)

    return out_flat.reshape(N, Cp, Pp)[:, :C, :P2].reshape(N, C, Hp, Wp)


def _reference(x, w1, b1, w2, b2):
    # Pure-JAX reference matching PyTorch semantics (incl. padding=1 on the 1x1).
    def inorm(y):
        m = y.mean(axis=(2, 3), keepdims=True)
        v = ((y - m) ** 2).mean(axis=(2, 3), keepdims=True)
        return (y - m) * lax.rsqrt(v + EPS)

    dn = ('NCHW', 'OIHW', 'NCHW')
    hp = lax.Precision.HIGHEST
    out = inorm(x)
    out = lax.conv_general_dilated(out, w1, (1, 1), ((1, 1), (1, 1)),
                                   dimension_numbers=dn, precision=hp)
    out = jnp.maximum(out + b1[None, :, None, None], 0.0)
    out = inorm(out)
    out = lax.conv_general_dilated(out, w2, (1, 1), ((1, 1), (1, 1)),
                                   dimension_numbers=dn, precision=hp)
    out = jnp.maximum(out + b2[None, :, None, None], 0.0)
    return out


if __name__ == "__main__":
    N, NF, H, W = 2, 4, 16, 16
    key = jax.random.PRNGKey(0)
    kx, k1, kb1, k2, kb2 = jax.random.split(key, 5)

    x = jax.random.normal(kx, (N, NF, H, W), dtype=jnp.float32)

    fan1 = NF * 3 * 3
    w1 = jax.random.uniform(k1, (NF, NF, 3, 3), jnp.float32, -1.0, 1.0) / np.sqrt(fan1)
    b1 = jax.random.uniform(kb1, (NF,), jnp.float32, -1.0, 1.0) / np.sqrt(fan1)
    fan2 = NF * 1 * 1
    w2 = jax.random.uniform(k2, (NF, NF, 1, 1), jnp.float32, -1.0, 1.0) / np.sqrt(fan2)
    b2 = jax.random.uniform(kb2, (NF,), jnp.float32, -1.0, 1.0) / np.sqrt(fan2)

    out = jax.block_until_ready(conv_ode_func(x, w1, b1, w2, b2))
    ref = _reference(x, w1, b1, w2, b2)

    assert out.shape == (N, NF, H + 2, W + 2), out.shape
    np.testing.assert_allclose(np.asarray(out), np.asarray(ref),
                               rtol=1e-4, atol=5e-5)
    print("KERNEL_OK")
</pallas_src>

<mosaic_0001>
module attributes {stable_mosaic.version = 11 : i64} {
  func.func @_conv_ode_kernel(%arg0: i32, %arg1: memref<8x384xf32, #tpu.memory_space<vmem>>, %arg2: memref<1x384xf32, #tpu.memory_space<vmem>>, %arg3: memref<8x72xf32, #tpu.memory_space<vmem>>, %arg4: memref<8x1xf32, #tpu.memory_space<vmem>>, %arg5: memref<8x8xf32, #tpu.memory_space<vmem>>, %arg6: memref<8x1xf32, #tpu.memory_space<vmem>>, %arg7: memref<8x384xf32, #tpu.memory_space<vmem>>) attributes {dimension_semantics = [#tpu.dimension_semantics<parallel>], iteration_bounds = array<i64: 2>, scalar_prefetch = 0 : i64, scratch_operands = 0 : i64, tpu.core_type = #tpu.core_type<tc>, window_params = [{transform_indices = @transform_0, window_bounds = array<i64: 8, 384>}, {pipeline_mode = #tpu.pipeline_mode<synchronous>, transform_indices = @transform_1, window_bounds = array<i64: 1, 384>}, {pipeline_mode = #tpu.pipeline_mode<synchronous>, transform_indices = @transform_2, window_bounds = array<i64: 8, 72>}, {pipeline_mode = #tpu.pipeline_mode<synchronous>, transform_indices = @transform_3, window_bounds = array<i64: 8, 1>}, {pipeline_mode = #tpu.pipeline_mode<synchronous>, transform_indices = @transform_4, window_bounds = array<i64: 8, 8>}, {pipeline_mode = #tpu.pipeline_mode<synchronous>, transform_indices = @transform_5, window_bounds = array<i64: 8, 1>}, {transform_indices = @transform_6, window_bounds = array<i64: 8, 384>}]} {
    %c0 = arith.constant 0 : index
    %c0_0 = arith.constant 0 : index
    %0 = vector.load %arg2[%c0, %c0_0] : memref<1x384xf32, #tpu.memory_space<vmem>>, vector<1x384xf32>
    %1 = vector.shape_cast %0 : vector<1x384xf32> to vector<1x384xf32>
    %2 = vector.broadcast %1 : vector<1x384xf32> to vector<8x384xf32>
    %c0_1 = arith.constant 0 : index
    %c0_2 = arith.constant 0 : index
    %3 = vector.load %arg3[%c0_1, %c0_2] : memref<8x72xf32, #tpu.memory_space<vmem>>, vector<8x72xf32>
    %c0_3 = arith.constant 0 : index
    %c0_4 = arith.constant 0 : index
    %4 = vector.load %arg5[%c0_3, %c0_4] : memref<8x8xf32, #tpu.memory_space<vmem>>, vector<8x8xf32>
    %c0_5 = arith.constant 0 : index
    %c0_6 = arith.constant 0 : index
    %5 = vector.load %arg4[%c0_5, %c0_6] : memref<8x1xf32, #tpu.memory_space<vmem>>, vector<8x1xf32>
    %c0_7 = arith.constant 0 : index
    %c0_8 = arith.constant 0 : index
    %6 = vector.load %arg6[%c0_7, %c0_8] : memref<8x1xf32, #tpu.memory_space<vmem>>, vector<8x1xf32>
    %c0_9 = arith.constant 0 : index
    %c0_10 = arith.constant 0 : index
    %7 = vector.load %arg1[%c0_9, %c0_10] : memref<8x384xf32, #tpu.memory_space<vmem>>, vector<8x384xf32>
    %cst = arith.constant dense<0.000000e+00> : vector<8xf32>
    %8 = vector.multi_reduction <add>, %7, %cst [1] : vector<8x384xf32> to vector<8xf32>
    %9 = vector.shape_cast %8 : vector<8xf32> to vector<8x1xf32>
    %cst_11 = arith.constant 3.906250e-03 : f32
    %10 = vector.broadcast %cst_11 : f32 to vector<8x1xf32>
    %11 = arith.mulf %9, %10 : vector<8x1xf32>
    %12 = arith.mulf %7, %7 : vector<8x384xf32>
    %cst_12 = arith.constant dense<0.000000e+00> : vector<8xf32>
    %13 = vector.multi_reduction <add>, %12, %cst_12 [1] : vector<8x384xf32> to vector<8xf32>
    %14 = vector.shape_cast %13 : vector<8xf32> to vector<8x1xf32>
    %cst_13 = arith.constant 3.906250e-03 : f32
    %15 = vector.broadcast %cst_13 : f32 to vector<8x1xf32>
    %16 = arith.mulf %14, %15 : vector<8x1xf32>
    %17 = arith.mulf %11, %11 : vector<8x1xf32>
    %18 = arith.subf %16, %17 : vector<8x1xf32>
    %19 = vector.broadcast %11 : vector<8x1xf32> to vector<8x384xf32>
    %20 = arith.subf %7, %19 : vector<8x384xf32>
    %cst_14 = arith.constant 9.99999974E-6 : f32
    %21 = vector.broadcast %cst_14 : f32 to vector<8x1xf32>
    %22 = arith.addf %18, %21 : vector<8x1xf32>
    %23 = math.rsqrt %22 : vector<8x1xf32>
    %24 = vector.broadcast %23 : vector<8x1xf32> to vector<8x384xf32>
    %25 = arith.mulf %20, %24 : vector<8x384xf32>
    %26 = arith.mulf %25, %2 : vector<8x384xf32>
    %c19_i32 = arith.constant 19 : i32
    %27 = tpu.dynamic_rotate %26 by %c19_i32 dim 1 : vector<8x384xf32>, i32 -> vector<8x384xf32>
    %c18_i32 = arith.constant 18 : i32
    %28 = tpu.dynamic_rotate %26 by %c18_i32 dim 1 : vector<8x384xf32>, i32 -> vector<8x384xf32>
    %c17_i32 = arith.constant 17 : i32
    %29 = tpu.dynamic_rotate %26 by %c17_i32 dim 1 : vector<8x384xf32>, i32 -> vector<8x384xf32>
    %c1_i32 = arith.constant 1 : i32
    %30 = tpu.dynamic_rotate %26 by %c1_i32 dim 1 : vector<8x384xf32>, i32 -> vector<8x384xf32>
    %c383_i32 = arith.constant 383 : i32
    %31 = tpu.dynamic_rotate %26 by %c383_i32 dim 1 : vector<8x384xf32>, i32 -> vector<8x384xf32>
    %c367_i32 = arith.constant 367 : i32
    %32 = tpu.dynamic_rotate %26 by %c367_i32 dim 1 : vector<8x384xf32>, i32 -> vector<8x384xf32>
    %c366_i32 = arith.constant 366 : i32
    %33 = tpu.dynamic_rotate %26 by %c366_i32 dim 1 : vector<8x384xf32>, i32 -> vector<8x384xf32>
    %c365_i32 = arith.constant 365 : i32
    %34 = tpu.dynamic_rotate %26 by %c365_i32 dim 1 : vector<8x384xf32>, i32 -> vector<8x384xf32>
    %35 = tpu.concatenate %27, %28, %29, %30, %26, %31, %32, %33, %34 in 0 : vector<8x384xf32>, vector<8x384xf32>, vector<8x384xf32>, vector<8x384xf32>, vector<8x384xf32>, vector<8x384xf32>, vector<8x384xf32>, vector<8x384xf32>, vector<8x384xf32> -> vector<72x384xf32>
    %cst_15 = arith.constant dense<0.000000e+00> : vector<8x384xf32>
    %36 = tpu.matmul %3, %35, %cst_15 {dimension_numbers = #tpu.dot_dimension_numbers<[1], [0], [0], [1], [0, 0, 1, 1], [], []>} : vector<8x72xf32>, vector<72x384xf32>, vector<8x384xf32> -> vector<8x384xf32>
    %37 = vector.broadcast %5 : vector<8x1xf32> to vector<8x384xf32>
    %38 = arith.addf %36, %37 : vector<8x384xf32>
    %cst_16 = arith.constant 0.000000e+00 : f32
    %39 = vector.broadcast %cst_16 : f32 to vector<8x384xf32>
    %40 = arith.maximumf %38, %39 : vector<8x384xf32>
    %41 = arith.mulf %40, %2 : vector<8x384xf32>
    %cst_17 = arith.constant dense<0.000000e+00> : vector<8xf32>
    %42 = vector.multi_reduction <add>, %41, %cst_17 [1] : vector<8x384xf32> to vector<8xf32>
    %43 = vector.shape_cast %42 : vector<8xf32> to vector<8x1xf32>
    %cst_18 = arith.constant 3.906250e-03 : f32
    %44 = vector.broadcast %cst_18 : f32 to vector<8x1xf32>
    %45 = arith.mulf %43, %44 : vector<8x1xf32>
    %46 = arith.mulf %41, %41 : vector<8x384xf32>
    %cst_19 = arith.constant dense<0.000000e+00> : vector<8xf32>
    %47 = vector.multi_reduction <add>, %46, %cst_19 [1] : vector<8x384xf32> to vector<8xf32>
    %48 = vector.shape_cast %47 : vector<8xf32> to vector<8x1xf32>
    %cst_20 = arith.constant 3.906250e-03 : f32
    %49 = vector.broadcast %cst_20 : f32 to vector<8x1xf32>
    %50 = arith.mulf %48, %49 : vector<8x1xf32>
    %51 = arith.mulf %45, %45 : vector<8x1xf32>
    %52 = arith.subf %50, %51 : vector<8x1xf32>
    %53 = vector.broadcast %45 : vector<8x1xf32> to vector<8x384xf32>
    %54 = arith.subf %41, %53 : vector<8x384xf32>
    %cst_21 = arith.constant 9.99999974E-6 : f32
    %55 = vector.broadcast %cst_21 : f32 to vector<8x1xf32>
    %56 = arith.addf %52, %55 : vector<8x1xf32>
    %57 = math.rsqrt %56 : vector<8x1xf32>
    %58 = vector.broadcast %57 : vector<8x1xf32> to vector<8x384xf32>
    %59 = arith.mulf %54, %58 : vector<8x384xf32>
    %60 = arith.mulf %59, %2 : vector<8x384xf32>
    %cst_22 = arith.constant dense<0.000000e+00> : vector<8x384xf32>
    %61 = tpu.matmul %4, %60, %cst_22 {dimension_numbers = #tpu.dot_dimension_numbers<[1], [0], [0], [1], [0, 0, 1, 1], [], []>} : vector<8x8xf32>, vector<8x384xf32>, vector<8x384xf32> -> vector<8x384xf32>
    %62 = vector.broadcast %6 : vector<8x1xf32> to vector<8x384xf32>
    %63 = arith.addf %61, %62 : vector<8x384xf32>
    %cst_23 = arith.constant 0.000000e+00 : f32
    %64 = vector.broadcast %cst_23 : f32 to vector<8x384xf32>
    %65 = arith.maximumf %63, %64 : vector<8x384xf32>
    %c0_24 = arith.constant 0 : index
    %c0_25 = arith.constant 0 : index
    %66 = vector.load %arg7[%c0_24, %c0_25] : memref<8x384xf32, #tpu.memory_space<vmem>>, vector<8x384xf32>
    tpu.vector_store %arg7[%c0_24, %c0_25], %65 {strides = array<i32>} : memref<8x384xf32, #tpu.memory_space<vmem>>, vector<8x384xf32>,
    return
  }
  func.func @transform_0(%arg0: i32) -> (i32, i32) {
    %c0_i32 = arith.constant 0 : i32
    %c0_i32_0 = arith.constant 0 : i32
    return %arg0, %c0_i32 : i32, i32
  }
  func.func @transform_1(%arg0: i32) -> (i32, i32) {
    %c0_i32 = arith.constant 0 : i32
    %c0_i32_0 = arith.constant 0 : i32
    %c0_i32_1 = arith.constant 0 : i32
    return %c0_i32, %c0_i32_0 : i32, i32
  }
  func.func @transform_2(%arg0: i32) -> (i32, i32) {
    %c0_i32 = arith.constant 0 : i32
    %c0_i32_0 = arith.constant 0 : i32
    %c0_i32_1 = arith.constant 0 : i32
    return %c0_i32, %c0_i32_0 : i32, i32
  }
  func.func @transform_3(%arg0: i32) -> (i32, i32) {
    %c0_i32 = arith.constant 0 : i32
    %c0_i32_0 = arith.constant 0 : i32
    %c0_i32_1 = arith.constant 0 : i32
    return %c0_i32, %c0_i32_0 : i32, i32
  }
  func.func @transform_4(%arg0: i32) -> (i32, i32) {
    %c0_i32 = arith.constant 0 : i32
    %c0_i32_0 = arith.constant 0 : i32
    %c0_i32_1 = arith.constant 0 : i32
    return %c0_i32, %c0_i32_0 : i32, i32
  }
  func.func @transform_5(%arg0: i32) -> (i32, i32) {
    %c0_i32 = arith.constant 0 : i32
    %c0_i32_0 = arith.constant 0 : i32
    %c0_i32_1 = arith.constant 0 : i32
    return %c0_i32, %c0_i32_0 : i32, i32
  }
  func.func @transform_6(%arg0: i32) -> (i32, i32) {
    %c0_i32 = arith.constant 0 : i32
    %c0_i32_0 = arith.constant 0 : i32
    return %arg0, %c0_i32 : i32, i32
  }
}

</mosaic_0001>

<llo_original>
// kernel: tpu_custom_call.1
$region0: #{tpu_custom_call.1}
  #allocation0 [shape = 'u32[]', space=smem, size = 0x4, offset = 0x4, fixed_abs, tag = 'smem constant byte address 0x4 - core index']
  #allocation1 [shape = 'u32[144,128]{1,0:T(1,128)}', space=vmem, size = 0x12000, scoped, tag = 'internal scratch']
  %s0 = inlined_call_operand.hbm [shape: f32[16,384], index: 0, kind: input, shape index: {}]
  %s1 = inlined_call_operand.vmem [shape: f32[1,384], index: 1, kind: input, shape index: {}]
  %s2 = inlined_call_operand.vmem [shape: f32[8,72], index: 2, kind: input, shape index: {}]
  %s3 = inlined_call_operand.vmem [shape: f32[8,1], index: 3, kind: input, shape index: {}]
  %s4 = inlined_call_operand.vmem [shape: f32[8,8], index: 4, kind: input, shape index: {}]
  %s5 = inlined_call_operand.vmem [shape: f32[8,1], index: 5, kind: input, shape index: {}]
  %s6 = inlined_call_operand.hbm [shape: f32[16,384], index: 6, kind: output, shape index: {}]
  %s7 = sld [smem:[#allocation0]]
  $region61: #{tpu_custom_call.1} parent=0
    _
  %s9 = ssub.s32 1, %s7
  %s10 = scalar_select 0, %s9, %s7
  $region1: #{tpu_custom_call.1} parent=0
    #allocation2 [shape = 'u8[24576]{0}', space=vmem, size = 0x6000, scoped, tag = 'input window, operand 0']
    #allocation3 [shape = 's32[2]{0}', space=sflag, size = 0x8, scoped, tag = 'scoped memory for tpu_custom_call.1']
    #allocation4 [shape = 's32[2]{0}', space=sflag, size = 0x8, scoped, tag = 'scoped memory for tpu_custom_call.1']
    #allocation5 [shape = 'u8[24576]{0}', space=vmem, size = 0x6000, scoped, tag = 'output window, operand 0']
    %11 = vsyncpa [#allocation3], 0
    %s12 = scalar_lea.sflag [#allocation3], 1
    %13 = vsyncpa %s12, 0
    %14 = vsyncpa [#allocation4], 0
    %s15 = scalar_lea.sflag [#allocation4], 1
    %16 = vsyncpa %s15, 0
    loop: start=0, step=1, limit=4
    $region2: #{tpu_custom_call.1} parent=1 // loop_pre_header
      _
    $region3: #{tpu_custom_call.1} parent=1 // loop_header
      %s18 = sphi 0, %s22
      %p19 = scmp.ge.s32.totalorder %s18, 4
      %s28 = sphi 0, %s30
      %s31 = sphi 0, %s28
      %s32 = sphi 0, %s31
      %s48 = sphi 0, %s32
      %s52 = sphi 0, %s52
      %s54 = sphi 0, %s52
      %s55 = sphi 0, %s54
      %s69 = sphi 0, %s55
      %s73 = sphi 0, %s73
      %s75 = sphi 0, %s73
      %s76 = sphi 0, %s75
      %s90 = sphi 0, %s76
      %s94 = sphi 0, %s94
      %s96 = sphi 0, %s94
      %s97 = sphi 0, %s96
      %s111 = sphi 0, %s97
      %s115 = sphi 0, %s115
      %s117 = sphi 0, %s115
      %s118 = sphi 0, %s117
      %s132 = sphi 0, %s118
      %s136 = sphi 0, %s136
      %s138 = sphi 0, %s136
      %s139 = sphi 0, %s138
      %s153 = sphi 0, %s139
      %s159 = sphi 0, %s161
      %s162 = sphi 0, %s159
      %s163 = sphi 0, %s162
      %s179 = sphi 0, %s163
    $region4: #{tpu_custom_call.1} parent=1 // loop_header_branch
      %21 = sbr.rel (%p19) target = $region8
    $region5: #{tpu_custom_call.1} parent=1 // loop_body
      %s23 = ssub.s32 %s18, 1
      %s24 = ssub.s32 %s18, 2
      %s25 = sadd.s32 %s18, 1
      %s26 = ssub.s32 %s18, %s25
      %p27 = scmp.eq.s32.totalorder %s26, 0
      %s29 = sadd.s32 %s28, 1
      %s30 = scalar_select %p27, %s28, %s29
      %p33 = pneg %p27
      %p34 = scmp.eq.s32.totalorder %s18, 1
      %p35 = por %p33, %p34
      %p36 = scmp.ne.s32.totalorder %s28, %s31
      %p37 = scmp.eq.s32.totalorder %s18, 0
      %p38 = por %p36, %p37
      %p39 = scmp.ne.s32.totalorder %s28, %s31
      %p40 = scmp.eq.s32.totalorder %s23, 1
      %p41 = por %p39, %p40
      %p42 = scmp.ne.s32.totalorder %s31, %s32
      %p43 = scmp.eq.s32.totalorder %s23, 0
      %p44 = por %p42, %p43
      %p45 = scmp.ne.s32.totalorder %s31, %s32
      %p46 = scmp.eq.s32.totalorder %s24, 1
      %p47 = por %p45, %p46
      %p49 = scmp.ne.s32.totalorder %s32, %s48
      %p50 = scmp.eq.s32.totalorder %s24, 0
      %p51 = por %p49, %p50
      %s53 = sadd.s32 %s52, 1
      %p56 = scmp.eq.s32.totalorder %s18, 1
      %p57 = scmp.ne.s32.totalorder %s52, %s54
      %p58 = scmp.eq.s32.totalorder %s18, 0
      %p59 = por %p57, %p58
      %p60 = scmp.ne.s32.totalorder %s52, %s54
      %p61 = scmp.eq.s32.totalorder %s23, 1
      %p62 = por %p60, %p61
      %p63 = scmp.ne.s32.totalorder %s54, %s55
      %p64 = scmp.eq.s32.totalorder %s23, 0
      %p65 = por %p63, %p64
      %p66 = scmp.ne.s32.totalorder %s54, %s55
      %p67 = scmp.eq.s32.totalorder %s24, 1
      %p68 = por %p66, %p67
      %p70 = scmp.ne.s32.totalorder %s55, %s69
      %p71 = scmp.eq.s32.totalorder %s24, 0
      %p72 = por %p70, %p71
      %s74 = sadd.s32 %s73, 1
      %p77 = scmp.eq.s32.totalorder %s18, 1
      %p78 = scmp.ne.s32.totalorder %s73, %s75
      %p79 = scmp.eq.s32.totalorder %s18, 0
      %p80 = por %p78, %p79
      %p81 = scmp.ne.s32.totalorder %s73, %s75
      %p82 = scmp.eq.s32.totalorder %s23, 1
      %p83 = por %p81, %p82
      %p84 = scmp.ne.s32.totalorder %s75, %s76
      %p85 = scmp.eq.s32.totalorder %s23, 0
      %p86 = por %p84, %p85
      %p87 = scmp.ne.s32.totalorder %s75, %s76
      %p88 = scmp.eq.s32.totalorder %s24, 1
      %p89 = por %p87, %p88
      %p91 = scmp.ne.s32.totalorder %s76, %s90
      %p92 = scmp.eq.s32.totalorder %s24, 0
      %p93 = por %p91, %p92
      %s95 = sadd.s32 %s94, 1
      %p98 = scmp.eq.s32.totalorder %s18, 1
      %p99 = scmp.ne.s32.totalorder %s94, %s96
      %p100 = scmp.eq.s32.totalorder %s18, 0
      %p101 = por %p99, %p100
      %p102 = scmp.ne.s32.totalorder %s94, %s96
      %p103 = scmp.eq.s32.totalorder %s23, 1
      %p104 = por %p102, %p103
      %p105 = scmp.ne.s32.totalorder %s96, %s97
      %p106 = scmp.eq.s32.totalorder %s23, 0
      %p107 = por %p105, %p106
      %p108 = scmp.ne.s32.totalorder %s96, %s97
      %p109 = scmp.eq.s32.totalorder %s24, 1
      %p110 = por %p108, %p109
      %p112 = scmp.ne.s32.totalorder %s97, %s111
      %p113 = scmp.eq.s32.totalorder %s24, 0
      %p114 = por %p112, %p113
      %s116 = sadd.s32 %s115, 1
      %p119 = scmp.eq.s32.totalorder %s18, 1
      %p120 = scmp.ne.s32.totalorder %s115, %s117
      %p121 = scmp.eq.s32.totalorder %s18, 0
      %p122 = por %p120, %p121
      %p123 = scmp.ne.s32.totalorder %s115, %s117
      %p124 = scmp.eq.s32.totalorder %s23, 1
      %p125 = por %p123, %p124
      %p126 = scmp.ne.s32.totalorder %s117, %s118
      %p127 = scmp.eq.s32.totalorder %s23, 0
      %p128 = por %p126, %p127
      %p129 = scmp.ne.s32.totalorder %s117, %s118
      %p130 = scmp.eq.s32.totalorder %s24, 1
      %p131 = por %p129, %p130
      %p133 = scmp.ne.s32.totalorder %s118, %s132
      %p134 = scmp.eq.s32.totalorder %s24, 0
      %p135 = por %p133, %p134
      %s137 = sadd.s32 %s136, 1
      %p140 = scmp.eq.s32.totalorder %s18, 1
      %p141 = scmp.ne.s32.totalorder %s136, %s138
      %p142 = scmp.eq.s32.totalorder %s18, 0
      %p143 = por %p141, %p142
      %p144 = scmp.ne.s32.totalorder %s136, %s138
      %p145 = scmp.eq.s32.totalorder %s23, 1
      %p146 = por %p144, %p145
      %p147 = scmp.ne.s32.totalorder %s138, %s139
      %p148 = scmp.eq.s32.totalorder %s23, 0
      %p149 = por %p147, %p148
      %p150 = scmp.ne.s32.totalorder %s138, %s139
      %p151 = scmp.eq.s32.totalorder %s24, 1
      %p152 = por %p150, %p151
      %p154 = scmp.ne.s32.totalorder %s139, %s153
      %p155 = scmp.eq.s32.totalorder %s24, 0
      %p156 = por %p154, %p155
      %s157 = ssub.s32 %s18, %s25
      %p158 = scmp.eq.s32.totalorder %s157, 0
      %s160 = sadd.s32 %s159, 1
      %s161 = scalar_select %p158, %s159, %s160
      %p164 = pneg %p158
      %p165 = scmp.eq.s32.totalorder %s18, 1
      %p166 = por %p164, %p165
      %p167 = scmp.ne.s32.totalorder %s159, %s162
      %p168 = scmp.eq.s32.totalorder %s18, 0
      %p169 = por %p167, %p168
      %p170 = scmp.ne.s32.totalorder %s159, %s162
      %p171 = scmp.eq.s32.totalorder %s23, 1
      %p172 = por %p170, %p171
      %p173 = scmp.ne.s32.totalorder %s162, %s163
      %p174 = scmp.eq.s32.totalorder %s23, 0
      %p175 = por %p173, %p174
      %p176 = scmp.ne.s32.totalorder %s162, %s163
      %p177 = scmp.eq.s32.totalorder %s24, 1
      %p178 = por %p176, %p177
      %p180 = scmp.ne.s32.totalorder %s163, %s179
      %p181 = scmp.eq.s32.totalorder %s24, 0
      %p182 = por %p180, %p181
      %p183 = scmp.le.s32.totalorder 1, %s18
      %p184 = scmp.lt.s32.totalorder %s18, 3
      %p185 = pnand %p183, %p184
      %p186 = pneg %p185
      // Predicated region
      $region9: #{tpu_custom_call.1} parent=5 // pred_check
        _
      $region10: #{tpu_custom_call.1} parent=5 // pred_check_branch
        %188 = sbr.rel (%p185) target = $region12
      $region11: #{tpu_custom_call.1} parent=5 // pred_region
        %s189 = ssub.s32 %s18, 1
        // Predicated region
        $region13: #{tpu_custom_call.1} parent=11 // pred_check
          %p190 = pneg %p65
        $region14: #{tpu_custom_call.1} parent=11 // pred_check_branch
          %192 = sbr.rel (%p190) target = $region16
        $region15: #{tpu_custom_call.1} parent=11 // pred_region
          _
        $region16: #{tpu_custom_call.1} parent=11 // pred_fallthru
          _
        // Predicated region
        $region17: #{tpu_custom_call.1} parent=11 // pred_check
          %p193 = pneg %p86
        $region18: #{tpu_custom_call.1} parent=11 // pred_check_branch
          %195 = sbr.rel (%p193) target = $region20
        $region19: #{tpu_custom_call.1} parent=11 // pred_region
          _
        $region20: #{tpu_custom_call.1} parent=11 // pred_fallthru
          _
        // Predicated region
        $region21: #{tpu_custom_call.1} parent=11 // pred_check
          %p196 = pneg %p107
        $region22: #{tpu_custom_call.1} parent=11 // pred_check_branch
          %198 = sbr.rel (%p196) target = $region24
        $region23: #{tpu_custom_call.1} parent=11 // pred_region
          _
        $region24: #{tpu_custom_call.1} parent=11 // pred_fallthru
          _
        // Predicated region
        $region25: #{tpu_custom_call.1} parent=11 // pred_check
          %p199 = pneg %p128
        $region26: #{tpu_custom_call.1} parent=11 // pred_check_branch
          %201 = sbr.rel (%p199) target = $region28
        $region27: #{tpu_custom_call.1} parent=11 // pred_region
          _
        $region28: #{tpu_custom_call.1} parent=11 // pred_fallthru
          _
        // Predicated region
        $region29: #{tpu_custom_call.1} parent=11 // pred_check
          %p202 = pneg %p149
        $region30: #{tpu_custom_call.1} parent=11 // pred_check_branch
          %204 = sbr.rel (%p202) target = $region32
        $region31: #{tpu_custom_call.1} parent=11 // pred_region
          _
        $region32: #{tpu_custom_call.1} parent=11 // pred_fallthru
          _
      $region12: #{tpu_custom_call.1} parent=5 // pred_fallthru
        _
      %p205 = scmp.lt.s32.totalorder %s18, 2
      // Predicated region
      $region33: #{tpu_custom_call.1} parent=5 // pred_check
        %p206 = pneg %p205
      $region34: #{tpu_custom_call.1} parent=5 // pred_check_branch
        %208 = sbr.rel (%p206) target = $region36
      $region35: #{tpu_custom_call.1} parent=5 // pred_region
        // Predicated region
        $region37: #{tpu_custom_call.1} parent=35 // pred_check
          %p209 = pneg %p38
        $region38: #{tpu_custom_call.1} parent=35 // pred_check_branch
          %211 = sbr.rel (%p209) target = $region40
        $region39: #{tpu_custom_call.1} parent=35 // pred_region
          %s212 = sand.u32 %s28, 1
          %s213 = scalar_lea.sflag [#allocation3], %s212
          %s214 = sand.u32 %s28, 1
          %s215 = smul.addr %s214, 24
          %s216 = scalar_lea.vmem [#allocation2], %s215
          %s218 = ssub.s32 384, 384
          %219 = vsyncadd %s213, %s218
          %s220 = smul.addr %s18, 3
          %s221 = smul.addr %s220, 128
          %s222 = scalar_lea.hbm %s0, %s221
          %s224 = sshll.u32 %s216, 4
          %s225 = int_to_ptr.vmem [resolvable:$true] %s224
          %227 = dma.hbm_to_vmem [thread:$0]  %s222, 384, %s225, %s213
        $region40: #{tpu_custom_call.1} parent=35 // pred_fallthru
          _
      $region36: #{tpu_custom_call.1} parent=5 // pred_fallthru
        _
      %p228 = scmp.le.s32.totalorder 1, %s18
      %p229 = scmp.lt.s32.totalorder %s18, 3
      %p230 = pnand %p228, %p229
      %p231 = pneg %p230
      // Predicated region
      $region41: #{tpu_custom_call.1} parent=5 // pred_check
        _
      $region42: #{tpu_custom_call.1} parent=5 // pred_check_branch
        %233 = sbr.rel (%p230) target = $region44
      $region43: #{tpu_custom_call.1} parent=5 // pred_region
        %s234 = ssub.s32 %s18, 1
        %s235 = sand.u32 %s31, 1
        %s236 = scalar_lea.sflag [#allocation3], %s235
        %s237 = sand.u32 %s31, 1
        %s238 = smul.addr %s237, 24
        %s239 = scalar_lea.vmem [#allocation2], %s238
        // Predicated region
        $region45: #{tpu_custom_call.1} parent=43 // pred_check
          %p240 = pneg %p44
        $region46: #{tpu_custom_call.1} parent=43 // pred_check_branch
          %242 = sbr.rel (%p240) target = $region48
        $region47: #{tpu_custom_call.1} parent=43 // pred_region
          %243 = dma.done %s236, 384
        $region48: #{tpu_custom_call.1} parent=43 // pred_fallthru
          _
        %s244 = sand.u32 %s31, 1
        %s245 = scalar_lea.sflag [#allocation3], %s244
        %s246 = sand.u32 %s31, 1
        %s247 = smul.addr %s246, 24
        %s248 = scalar_lea.vmem [#allocation2], %s247
        %p249 = pneg %p44
        %p250 = pneg %p41
        %p251 = pneg %p65
        %p252 = pneg %p62
        %p253 = pneg %p86
        %p254 = pneg %p83
        %p255 = pneg %p107
        %p256 = pneg %p104
        %p257 = pneg %p128
        %p258 = pneg %p125
        %p259 = pneg %p149
        %p260 = pneg %p146
        %p261 = pneg %p175
        %p262 = pneg %p172
        %s263 = sand.u32 %s162, 1
        %s264 = scalar_lea.sflag [#allocation4], %s263
        %s265 = sand.u32 %s162, 1
        %s266 = smul.addr %s265, 24
        %s267 = scalar_lea.vmem [#allocation5], %s266
        %v268 = vld [vmem:[%s1] sm:$0x7]
        %v270 = vlaneseq
        %v271 = vshrl.u32 %v270, 7
        %v272 = vsub.s32 0, %v271
        %v273 = vrot.slane %v268, %v272
        %v274 = vlaneseq
        %v275 = vshrl.u32 %v274, 7
        %v276 = vsub.s32 1, %v275
        %v277 = vrot.slane %v268, %v276
        %v278 = vlaneseq
        %v279 = vshrl.u32 %v278, 7
        %v280 = vsub.s32 2, %v279
        %v281 = vrot.slane %v268, %v280
        %v285 = vld [vmem:[%s2] sm:$0xff]
        %v286 = vld [vmem:[%s4] sm:$0xff]
        %v287 = vld [vmem:[%s3] sm:$0xff]
        %v288 = vld [vmem:[%s5] sm:$0xff]
        %v289 = vld [vmem:[%s239] sm:$0xff]
        %v290 = vld [vmem:[%s239 + $0x8] sm:$0xff]
        %v291 = vld [vmem:[%s239 + $0x10] sm:$0xff]
        %v292 = vadd.f32 %v289, %v290
        %v293 = vadd.f32 %v292, %v291
        %294 = vadd.xlane.f32.xlu0 %v293
        %v295 = vpop.xlane.xlu0 %294
        %v296 = vmul.f32 %v295, 0.00390625
        %v297 = vmul.f32 %v289, %v289
        %v298 = vmul.f32 %v290, %v290
        %v299 = vmul.f32 %v291, %v291
        %v300 = vadd.f32 %v297, %v298
        %v301 = vadd.f32 %v300, %v299
        %302 = vadd.xlane.f32.xlu0 %v301
        %v303 = vpop.xlane.xlu0 %302
        %v304 = vmul.f32 %v303, 0.00390625
        %v305 = vmul.f32 %v296, %v296
        %v306 = vsub.f32 %v304, %v305
        %v307 = vsub.f32 %v289, %v296
        %v308 = vsub.f32 %v290, %v296
        %v309 = vsub.f32 %v291, %v296
        %v310 = vadd.f32 %v306, 1e-05
        %v311 = vrsqrt.pop %v310
        %v312 = vmul.f32 %v307, %v311
        %v313 = vmul.f32 %v308, %v311
        %v314 = vmul.f32 %v309, %v311
        %v315 = vmul.f32 %v312, %v273
        %v316 = vmul.f32 %v313, %v277
        %v317 = vmul.f32 %v314, %v281
        %318 = vrot.lane.b32.xlu0 %v315, 19
        %v319 = vpop.permute.xlu0 %318
        %320 = vrot.lane.b32.xlu0 %v316, 19
        %v321 = vpop.permute.xlu0 %320
        %322 = vrot.lane.b32.xlu0 %v317, 19
        %v323 = vpop.permute.xlu0 %322
        %v324 = vlaneseq
        %v325 = vand.u32 %v324, 127
        %vm326 = vcmp.lt.s32.totalorder %v325, 19
        %v327 = vsel %vm326, %v321, %v323
        %v328 = vsel %vm326, %v319, %v321
        %v329 = vsel %vm326, %v323, %v319
        %330 = vrot.lane.b32.xlu0 %v315, 18
        %v331 = vpop.permute.xlu0 %330
        %332 = vrot.lane.b32.xlu0 %v316, 18
        %v333 = vpop.permute.xlu0 %332
        %334 = vrot.lane.b32.xlu0 %v317, 18
        %v335 = vpop.permute.xlu0 %334
        %vm336 = vcmp.lt.s32.totalorder %v325, 18
        %v337 = vsel %vm336, %v333, %v335
        %v338 = vsel %vm336, %v331, %v333
        %v339 = vsel %vm336, %v335, %v331
        %340 = vrot.lane.b32.xlu0 %v315, 17
        %v341 = vpop.permute.xlu0 %340
        %342 = vrot.lane.b32.xlu0 %v316, 17
        %v343 = vpop.permute.xlu0 %342
        %344 = vrot.lane.b32.xlu0 %v317, 17
        %v345 = vpop.permute.xlu0 %344
        %vm346 = vcmp.lt.s32.totalorder %v325, 17
        %v347 = vsel %vm346, %v343, %v345
        %v348 = vsel %vm346, %v341, %v343
        %v349 = vsel %vm346, %v345, %v341
        %350 = vrot.lane.b32.xlu0 %v315, 1
        %v351 = vpop.permute.xlu0 %350
        %352 = vrot.lane.b32.xlu0 %v316, 1
        %v353 = vpop.permute.xlu0 %352
        %354 = vrot.lane.b32.xlu0 %v317, 1
        %v355 = vpop.permute.xlu0 %354
        %vm356 = vcmp.lt.s32.totalorder %v325, 1
        %v357 = vsel %vm356, %v353, %v355
        %v358 = vsel %vm356, %v351, %v353
        %v359 = vsel %vm356, %v355, %v351
        %360 = vrot.lane.b32.xlu0 %v315, 127
        %v361 = vpop.permute.xlu0 %360
        %362 = vrot.lane.b32.xlu0 %v316, 127
        %v363 = vpop.permute.xlu0 %362
        %364 = vrot.lane.b32.xlu0 %v317, 127
        %v365 = vpop.permute.xlu0 %364
        %vm366 = vcmp.lt.s32.totalorder %v325, 127
        %v367 = vsel %vm366, %v363, %v365
        %v368 = vsel %vm366, %v361, %v363
        %v369 = vsel %vm366, %v365, %v361
        %370 = vrot.lane.b32.xlu0 %v315, 111
        %v371 = vpop.permute.xlu0 %370
        %372 = vrot.lane.b32.xlu0 %v316, 111
        %v373 = vpop.permute.xlu0 %372
        %374 = vrot.lane.b32.xlu0 %v317, 111
        %v375 = vpop.permute.xlu0 %374
        %vm376 = vcmp.lt.s32.totalorder %v325, 111
        %v377 = vsel %vm376, %v373, %v375
        %v378 = vsel %vm376, %v371, %v373
        %v379 = vsel %vm376, %v375, %v371
        %380 = vrot.lane.b32.xlu0 %v315, 110
        %v381 = vpop.permute.xlu0 %380
        %382 = vrot.lane.b32.xlu0 %v316, 110
        %v383 = vpop.permute.xlu0 %382
        %384 = vrot.lane.b32.xlu0 %v317, 110
        %v385 = vpop.permute.xlu0 %384
        %vm386 = vcmp.lt.s32.totalorder %v325, 110
        %v387 = vsel %vm386, %v383, %v385
        %v388 = vsel %vm386, %v381, %v383
        %v389 = vsel %vm386, %v385, %v381
        %390 = vrot.lane.b32.xlu0 %v315, 109
        %v391 = vpop.permute.xlu0 %390
        %392 = vrot.lane.b32.xlu0 %v316, 109
        %v393 = vpop.permute.xlu0 %392
        %394 = vrot.lane.b32.xlu0 %v317, 109
        %v395 = vpop.permute.xlu0 %394
        %vm396 = vcmp.lt.s32.totalorder %v325, 109
        %v397 = vsel %vm396, %v393, %v395
        %v398 = vsel %vm396, %v391, %v393
        %v399 = vsel %vm396, %v395, %v391
        %401 = vset.pattern.permute.xlu0 0
        %402 = vperm.xlu0 %401, %v287
        %v403 = vpop.permute.xlu0 %402
        %vm405 = vcmask 588800
        %v407 = vsel %vm405, %v285, 0
        %409 = vmatprep.subr.mxu0 0.0
        %410 = vmatpush1.msra.mxu0 0.0
        %411 = vmatprep.subr.mxu0 0.0
        %412 = vmatpush1.msra.mxu0 0.0
        %413 = vmatprep.subr.mxu0 0.0
        %414 = vmatpush1.msra.mxu0 0.0
        %415 = vmatprep.subr.mxu0 0.0
        %416 = vmatpush1.msra.mxu0 0.0
        %417 = vmatprep.subr.mxu0 0.0
        %418 = vmatpush1.msra.mxu0 0.0
        %419 = vmatprep.subr.mxu0 0.0
        %420 = vmatpush1.msra.mxu0 0.0
        %421 = vmatprep.subr.mxu0 0.0
        %422 = vmatpush1.msra.mxu0 0.0
        %423 = vmatprep.subr.mxu0 %v397
        %424 = vmatpush1.msra.mxu0 %v398
        %425 = vmatprep.subr.mxu0 %v387
        %426 = vmatpush1.msra.mxu0 %v388
        %427 = vmatprep.subr.mxu0 %v377
        %428 = vmatpush1.msra.mxu0 %v378
        %429 = vmatprep.subr.mxu0 %v367
        %430 = vmatpush1.msra.mxu0 %v368
        %431 = vmatprep.subr.mxu0 %v316
        %432 = vmatpush1.msra.mxu0 %v315
        %433 = vmatprep.subr.mxu0 %v358
        %434 = vmatpush1.msra.mxu0 %v359
        %435 = vmatprep.subr.mxu0 %v348
        %436 = vmatpush1.msra.mxu0 %v349
        %437 = vmatprep.subr.mxu0 %v338
        %438 = vmatpush1.msra.mxu0 %v339
        %439 = vmatprep.subr.mxu0 %v328
        %440 = vmatpush1.msra.mxu0 %v329
        %441 = vmatprep.subr.mxu0 0.0
        %442 = vmatpush2.msra.mxu0 0.0
        %443 = vmatprep.subr.mxu0 0.0
        %444 = vmatpush2.msra.mxu0 0.0
        %445 = vmatprep.subr.mxu0 0.0
        %446 = vmatpush2.msra.mxu0 0.0
        %447 = vmatprep.subr.mxu0 0.0
        %448 = vmatpush2.msra.mxu0 0.0
        %449 = vmatprep.subr.mxu0 0.0
        %450 = vmatpush2.msra.mxu0 0.0
        %451 = vmatprep.subr.mxu0 0.0
        %452 = vmatpush2.msra.mxu0 0.0
        %453 = vmatprep.subr.mxu0 0.0
        %454 = vmatpush2.msra.mxu0 0.0
        %455 = vmatprep.subr.mxu0 0.0
        %456 = vmatpush2.msra.mxu0 0.0
        %457 = vmatprep.subr.mxu0 0.0
        %458 = vmatpush2.msra.mxu0 0.0
        %459 = vmatprep.subr.mxu0 0.0
        %460 = vmatpush2.msra.mxu0 0.0
        %461 = vmatprep.subr.mxu0 0.0
        %462 = vmatpush2.msra.mxu0 0.0
        %463 = vmatprep.subr.mxu0 0.0
        %464 = vmatpush2.msra.mxu0 0.0
        %465 = vmatprep.subr.mxu0 0.0
        %466 = vmatpush2.msra.mxu0 0.0
        %467 = vmatprep.subr.mxu0 0.0
        %468 = vmatpush2.msra.mxu0 0.0
        %469 = vmatprep.subr.mxu0 0.0
        %470 = vmatpush2.msra.mxu0 0.0
        %471 = vmatprep.subr.mxu0 0.0
        %472 = vmatpush2.msra.mxu0 0.0
        %473 = vmatprep.mubr.f32.mxu0 0.0
        %474 = vmatmul.mubr.f32.gmra.mxu0 %v407
        %v475 = vpop.f32.mrf.mxu0
        %v476 = vadd.f32 %v403, %v475
        %v477 = vpop.f32.mrf.mxu0
        %v478 = vadd.f32 %v403, %v477
        %479 = vdwg.mxu0
        %480 = vmatprep.subr.mxu0 0.0
        %481 = vmatpush1.msra.mxu0 0.0
        %482 = vmatprep.subr.mxu0 0.0
        %483 = vmatpush1.msra.mxu0 0.0
        %484 = vmatprep.subr.mxu0 0.0
        %485 = vmatpush1.msra.mxu0 0.0
        %486 = vmatprep.subr.mxu0 0.0
        %487 = vmatpush1.msra.mxu0 0.0
        %488 = vmatprep.subr.mxu0 0.0
        %489 = vmatpush1.msra.mxu0 0.0
        %490 = vmatprep.subr.mxu0 0.0
        %491 = vmatpush1.msra.mxu0 0.0
        %492 = vmatprep.subr.mxu0 0.0
        %493 = vmatpush1.msra.mxu0 0.0
        %494 = vmatprep.subr.mxu0 0.0
        %495 = vmatpush1.msra.mxu0 %v399
        %496 = vmatprep.subr.mxu0 0.0
        %497 = vmatpush1.msra.mxu0 %v389
        %498 = vmatprep.subr.mxu0 0.0
        %499 = vmatpush1.msra.mxu0 %v379
        %500 = vmatprep.subr.mxu0 0.0
        %501 = vmatpush1.msra.mxu0 %v369
        %502 = vmatprep.subr.mxu0 0.0
        %503 = vmatpush1.msra.mxu0 %v317
        %504 = vmatprep.subr.mxu0 0.0
        %505 = vmatpush1.msra.mxu0 %v357
        %506 = vmatprep.subr.mxu0 0.0
        %507 = vmatpush1.msra.mxu0 %v347
        %508 = vmatprep.subr.mxu0 0.0
        %509 = vmatpush1.msra.mxu0 %v337
        %510 = vmatprep.subr.mxu0 0.0
        %511 = vmatpush1.msra.mxu0 %v327
        %512 = vmatprep.subr.mxu0 0.0
        %513 = vmatpush2.msra.mxu0 0.0
        %514 = vmatprep.subr.mxu0 0.0
        %515 = vmatpush2.msra.mxu0 0.0
        %516 = vmatprep.subr.mxu0 0.0
        %517 = vmatpush2.msra.mxu0 0.0
        %518 = vmatprep.subr.mxu0 0.0
        %519 = vmatpush2.msra.mxu0 0.0
        %520 = vmatprep.subr.mxu0 0.0
        %521 = vmatpush2.msra.mxu0 0.0
        %522 = vmatprep.subr.mxu0 0.0
        %523 = vmatpush2.msra.mxu0 0.0
        %524 = vmatprep.subr.mxu0 0.0
        %525 = vmatpush2.msra.mxu0 0.0
        %526 = vmatprep.subr.mxu0 0.0
        %527 = vmatpush2.msra.mxu0 0.0
        %528 = vmatprep.subr.mxu0 0.0
        %529 = vmatpush2.msra.mxu0 0.0
        %530 = vmatprep.subr.mxu0 0.0
        %531 = vmatpush2.msra.mxu0 0.0
        %532 = vmatprep.subr.mxu0 0.0
        %533 = vmatpush2.msra.mxu0 0.0
        %534 = vmatprep.subr.mxu0 0.0
        %535 = vmatpush2.msra.mxu0 0.0
        %536 = vmatprep.subr.mxu0 0.0
        %537 = vmatpush2.msra.mxu0 0.0
        %538 = vmatprep.subr.mxu0 0.0
        %539 = vmatpush2.msra.mxu0 0.0
        %540 = vmatprep.subr.mxu0 0.0
        %541 = vmatpush2.msra.mxu0 0.0
        %542 = vmatprep.subr.mxu0 0.0
        %543 = vmatpush2.msra.mxu0 0.0
        %544 = vmatprep.mubr.f32.mxu0 0.0
        %545 = vmatmul.mubr.f32.gmra.mxu0 %v407
        %v546 = vpop.f32.mrf.mxu0
        %v547 = vadd.f32 %v403, %v546
        %v548 = vpop.f32.mrf.mxu0
        %549 = vdwg.mxu0
        %v550 = vmax.f32 %v476, 0.0
        %v551 = vmax.f32 %v478, 0.0
        %v552 = vmax.f32 %v547, 0.0
        %v553 = vmul.f32 %v550, %v273
        %v554 = vmul.f32 %v551, %v277
        %v555 = vmul.f32 %v552, %v281
        %v556 = vadd.f32 %v553, %v554
        %v557 = vadd.f32 %v556, %v555
        %558 = vadd.xlane.f32.xlu0 %v557
        %v559 = vpop.xlane.xlu0 %558
        %v560 = vmul.f32 %v559, 0.00390625
        %v561 = vmul.f32 %v553, %v553
        %v562 = vmul.f32 %v554, %v554
        %v563 = vmul.f32 %v555, %v555
        %v564 = vadd.f32 %v561, %v562
        %v565 = vadd.f32 %v564, %v563
        %566 = vadd.xlane.f32.xlu0 %v565
        %v567 = vpop.xlane.xlu0 %566
        %v568 = vmul.f32 %v567, 0.00390625
        %v569 = vmul.f32 %v560, %v560
        %v570 = vsub.f32 %v568, %v569
        %v571 = vsub.f32 %v553, %v560
        %v572 = vsub.f32 %v554, %v560
        %v573 = vsub.f32 %v555, %v560
        %v574 = vadd.f32 %v570, 1e-05
        %v575 = vrsqrt.pop %v574
        %v576 = vmul.f32 %v571, %v575
        %v577 = vmul.f32 %v572, %v575
        %v578 = vmul.f32 %v573, %v575
        %v579 = vmul.f32 %v576, %v273
        %v580 = vmul.f32 %v577, %v277
        %v581 = vmul.f32 %v578, %v281
        %583 = vset.pattern.permute.xlu0 0
        %584 = vperm.xlu0 %583, %v288
        %v585 = vpop.permute.xlu0 %584
        %vm587 = vcmask 64512
        %v589 = vsel %vm587, %v286, 0
        %591 = vmatprep.subr.mxu0 0.0
        %592 = vmatpush1.msra.mxu0 0.0
        %593 = vmatprep.subr.mxu0 0.0
        %594 = vmatpush1.msra.mxu0 0.0
        %595 = vmatprep.subr.mxu0 0.0
        %596 = vmatpush1.msra.mxu0 0.0
        %597 = vmatprep.subr.mxu0 0.0
        %598 = vmatpush1.msra.mxu0 0.0
        %599 = vmatprep.subr.mxu0 0.0
        %600 = vmatpush1.msra.mxu0 0.0
        %601 = vmatprep.subr.mxu0 0.0
        %602 = vmatpush1.msra.mxu0 0.0
        %603 = vmatprep.subr.mxu0 0.0
        %604 = vmatpush1.msra.mxu0 0.0
        %605 = vmatprep.subr.mxu0 0.0
        %606 = vmatpush1.msra.mxu0 0.0
        %607 = vmatprep.subr.mxu0 0.0
        %608 = vmatpush1.msra.mxu0 0.0
        %609 = vmatprep.subr.mxu0 0.0
        %610 = vmatpush1.msra.mxu0 0.0
        %611 = vmatprep.subr.mxu0 0.0
        %612 = vmatpush1.msra.mxu0 0.0
        %613 = vmatprep.subr.mxu0 0.0
        %614 = vmatpush1.msra.mxu0 0.0
        %615 = vmatprep.subr.mxu0 0.0
        %616 = vmatpush1.msra.mxu0 0.0
        %617 = vmatprep.subr.mxu0 0.0
        %618 = vmatpush1.msra.mxu0 0.0
        %619 = vmatprep.subr.mxu0 0.0
        %620 = vmatpush1.msra.mxu0 0.0
        %621 = vmatprep.subr.mxu0 %v580
        %622 = vmatpush1.msra.mxu0 %v579
        %623 = vmatprep.subr.mxu0 0.0
        %624 = vmatpush2.msra.mxu0 0.0
        %625 = vmatprep.subr.mxu0 0.0
        %626 = vmatpush2.msra.mxu0 0.0
        %627 = vmatprep.subr.mxu0 0.0
        %628 = vmatpush2.msra.mxu0 0.0
        %629 = vmatprep.subr.mxu0 0.0
        %630 = vmatpush2.msra.mxu0 0.0
        %631 = vmatprep.subr.mxu0 0.0
        %632 = vmatpush2.msra.mxu0 0.0
        %633 = vmatprep.subr.mxu0 0.0
        %634 = vmatpush2.msra.mxu0 0.0
        %635 = vmatprep.subr.mxu0 0.0
        %636 = vmatpush2.msra.mxu0 0.0
        %637 = vmatprep.subr.mxu0 0.0
        %638 = vmatpush2.msra.mxu0 0.0
        %639 = vmatprep.subr.mxu0 0.0
        %640 = vmatpush2.msra.mxu0 0.0
        %641 = vmatprep.subr.mxu0 0.0
        %642 = vmatpush2.msra.mxu0 0.0
        %643 = vmatprep.subr.mxu0 0.0
        %644 = vmatpush2.msra.mxu0 0.0
        %645 = vmatprep.subr.mxu0 0.0
        %646 = vmatpush2.msra.mxu0 0.0
        %647 = vmatprep.subr.mxu0 0.0
        %648 = vmatpush2.msra.mxu0 0.0
        %649 = vmatprep.subr.mxu0 0.0
        %650 = vmatpush2.msra.mxu0 0.0
        %651 = vmatprep.subr.mxu0 0.0
        %652 = vmatpush2.msra.mxu0 0.0
        %653 = vmatprep.subr.mxu0 0.0
        %654 = vmatpush2.msra.mxu0 0.0
        %655 = vmatprep.mubr.f32.mxu0 0.0
        %656 = vmatmul.mubr.f32.gmra.mxu0 %v589
        %v657 = vpop.f32.mrf.mxu0
        %v658 = vadd.f32 %v585, %v657
        %v659 = vpop.f32.mrf.mxu0
        %v660 = vadd.f32 %v585, %v659
        %661 = vdwg.mxu0
        %662 = vmatprep.subr.mxu0 0.0
        %663 = vmatpush1.msra.mxu0 0.0
        %664 = vmatprep.subr.mxu0 0.0
        %665 = vmatpush1.msra.mxu0 0.0
        %666 = vmatprep.subr.mxu0 0.0
        %667 = vmatpush1.msra.mxu0 0.0
        %668 = vmatprep.subr.mxu0 0.0
        %669 = vmatpush1.msra.mxu0 0.0
        %670 = vmatprep.subr.mxu0 0.0
        %671 = vmatpush1.msra.mxu0 0.0
        %672 = vmatprep.subr.mxu0 0.0
        %673 = vmatpush1.msra.mxu0 0.0
        %674 = vmatprep.subr.mxu0 0.0
        %675 = vmatpush1.msra.mxu0 0.0
        %676 = vmatprep.subr.mxu0 0.0
        %677 = vmatpush1.msra.mxu0 0.0
        %678 = vmatprep.subr.mxu0 0.0
        %679 = vmatpush1.msra.mxu0 0.0
        %680 = vmatprep.subr.mxu0 0.0
        %681 = vmatpush1.msra.mxu0 0.0
        %682 = vmatprep.subr.mxu0 0.0
        %683 = vmatpush1.msra.mxu0 0.0
        %684 = vmatprep.subr.mxu0 0.0
        %685 = vmatpush1.msra.mxu0 0.0
        %686 = vmatprep.subr.mxu0 0.0
        %687 = vmatpush1.msra.mxu0 0.0
        %688 = vmatprep.subr.mxu0 0.0
        %689 = vmatpush1.msra.mxu0 0.0
        %690 = vmatprep.subr.mxu0 0.0
        %691 = vmatpush1.msra.mxu0 0.0
        %692 = vmatprep.subr.mxu0 0.0
        %693 = vmatpush1.msra.mxu0 %v581
        %694 = vmatprep.subr.mxu0 0.0
        %695 = vmatpush2.msra.mxu0 0.0
        %696 = vmatprep.subr.mxu0 0.0
        %697 = vmatpush2.msra.mxu0 0.0
        %698 = vmatprep.subr.mxu0 0.0
        %699 = vmatpush2.msra.mxu0 0.0
        %700 = vmatprep.subr.mxu0 0.0
        %701 = vmatpush2.msra.mxu0 0.0
        %702 = vmatprep.subr.mxu0 0.0
        %703 = vmatpush2.msra.mxu0 0.0
        %704 = vmatprep.subr.mxu0 0.0
        %705 = vmatpush2.msra.mxu0 0.0
        %706 = vmatprep.subr.mxu0 0.0
        %707 = vmatpush2.msra.mxu0 0.0
        %708 = vmatprep.subr.mxu0 0.0
        %709 = vmatpush2.msra.mxu0 0.0
        %710 = vmatprep.subr.mxu0 0.0
        %711 = vmatpush2.msra.mxu0 0.0
        %712 = vmatprep.subr.mxu0 0.0
        %713 = vmatpush2.msra.mxu0 0.0
        %714 = vmatprep.subr.mxu0 0.0
        %715 = vmatpush2.msra.mxu0 0.0
        %716 = vmatprep.subr.mxu0 0.0
        %717 = vmatpush2.msra.mxu0 0.0
        %718 = vmatprep.subr.mxu0 0.0
        %719 = vmatpush2.msra.mxu0 0.0
        %720 = vmatprep.subr.mxu0 0.0
        %721 = vmatpush2.msra.mxu0 0.0
        %722 = vmatprep.subr.mxu0 0.0
        %723 = vmatpush2.msra.mxu0 0.0
        %724 = vmatprep.subr.mxu0 0.0
        %725 = vmatpush2.msra.mxu0 0.0
        %726 = vmatprep.mubr.f32.mxu0 0.0
        %727 = vmatmul.mubr.f32.gmra.mxu0 %v589
        %v728 = vpop.f32.mrf.mxu0
        %v729 = vadd.f32 %v585, %v728
        %v730 = vpop.f32.mrf.mxu0
        %731 = vdwg.mxu0
        %v732 = vmax.f32 %v658, 0.0
        %v733 = vmax.f32 %v660, 0.0
        %v734 = vmax.f32 %v729, 0.0
        %735 = vst [vmem:[%s267] sm:$0xff] %v732
        %736 = vst [vmem:[%s267 + $0x8] sm:$0xff] %v733
        %737 = vst [vmem:[%s267 + $0x10] sm:$0xff] %v734
        %s738 = sand.u32 %s162, 1
        %s739 = scalar_lea.sflag [#allocation4], %s738
        %s740 = sand.u32 %s162, 1
        %s741 = smul.addr %s740, 24
        %s742 = scalar_lea.vmem [#allocation5], %s741
        // Predicated region
        $region49: #{tpu_custom_call.1} parent=43 // pred_check
          %p743 = pneg %p172
        $region50: #{tpu_custom_call.1} parent=43 // pred_check_branch
          %745 = sbr.rel (%p743) target = $region52
        $region51: #{tpu_custom_call.1} parent=43 // pred_region
          %s747 = ssub.s32 384, 384
          %748 = vsyncadd %s739, %s747
          %s749 = smul.addr %s23, 3
          %s750 = smul.addr %s749, 128
          %s751 = scalar_lea.hbm %s6, %s750
          %s753 = sshll.u32 %s742, 4
          %s754 = int_to_ptr.vmem [resolvable:$true] %s753
          %756 = dma.vmem_to_hbm [thread:$0]  %s754, 384, %s751, %s739
        $region52: #{tpu_custom_call.1} parent=43 // pred_fallthru
          _
      $region44: #{tpu_custom_call.1} parent=5 // pred_fallthru
        _
      %p757 = scmp.le.s32.totalorder 2, %s18
      // Predicated region
      $region53: #{tpu_custom_call.1} parent=5 // pred_check
        %p758 = pneg %p757
      $region54: #{tpu_custom_call.1} parent=5 // pred_check_branch
        %760 = sbr.rel (%p758) target = $region56
      $region55: #{tpu_custom_call.1} parent=5 // pred_region
        %s761 = ssub.s32 %s18, 2
        // Predicated region
        $region57: #{tpu_custom_call.1} parent=55 // pred_check
          %p762 = pneg %p178
        $region58: #{tpu_custom_call.1} parent=55 // pred_check_branch
          %764 = sbr.rel (%p762) target = $region60
        $region59: #{tpu_custom_call.1} parent=55 // pred_region
          %s765 = sand.u32 %s163, 1
          %s766 = scalar_lea.sflag [#allocation4], %s765
          %s767 = sand.u32 %s163, 1
          %s768 = smul.addr %s767, 24
          %s769 = scalar_lea.vmem [#allocation5], %s768
          %770 = dma.done %s766, 384
        $region60: #{tpu_custom_call.1} parent=55 // pred_fallthru
          _
      $region56: #{tpu_custom_call.1} parent=5 // pred_fallthru
        _
    $region6: #{tpu_custom_call.1} parent=1 // loop_footer
      %s22 = sadd.s32 1, %s18
    $region7: #{tpu_custom_call.1} parent=1 // loop_footer_branch
      %17 = sbr.rel target = $region3
    $region8: #{tpu_custom_call.1} parent=1 // loop_exit
      _
    %771 = vsyncpa [#allocation3], 1
    %s772 = scalar_lea.sflag [#allocation3], 1
    %773 = vsyncpa %s772, 1
    %774 = vsyncpa [#allocation4], 1
    %s775 = scalar_lea.sflag [#allocation4], 1
    %776 = vsyncpa %s775, 1

</llo_original>
